<compile_context>
chip_gen: v5e
topology: v5e:2x2
jax: 0.10.0
libtpu: 0.0.40
codegen_flags: <defaults>
</compile_context>

<pallas_src>
import jax
import jax.numpy as jnp
from jax.experimental import pallas as pl
from jax.experimental.pallas import tpu as pltpu

IN_FEATURES = 14
OUT_FEATURES = 1
LANES = 128                       # batch rows packed per output lane group
GROUP_K = LANES * IN_FEATURES     # 1792: contraction dim after batch-to-lanes reshape
DEFAULT_TILE_ROWS = 256           # 256 reshaped rows = 32768 batch rows per grid step


def _linreg_kernel(x_ref, w_ref, b_ref, o_ref):
    # x_ref: (tile_rows, 1792) VMEM  -- 128 batch rows per reshaped row (lane-dense)
    # w_ref: (1792, 128)       VMEM  -- block-diagonal weight, resident across the grid
    # b_ref: (1,)              SMEM  -- scalar bias
    # o_ref: (tile_rows, 128)  VMEM  -- lane-dense output: (r, j) = batch row 128*r + j
    o_ref[...] = (
        jnp.dot(x_ref[...], w_ref[...], preferred_element_type=jnp.float32)
        + b_ref[0]
    )


@jax.jit
def linear_regression_forward(x, weight, bias):
    """Equivalent of nn.Linear(14, 1): out = x @ weight.T + bias.

    x:      (N, 14) float32
    weight: (1, 14) float32   (PyTorch convention: (out_features, in_features))
    bias:   (1,)    float32
    returns (N, 1)  float32
    """
    n, k = x.shape
    assert k == IN_FEATURES

    # Pad only the <128-row tail so the batch can be viewed lane-dense.  For
    # n % 128 == 0 this is a no-op and the reshape below is a pure bitcast.
    n_pad = pl.cdiv(n, LANES) * LANES
    if n_pad != n:
        x = jnp.pad(x, ((0, n_pad - n), (0, 0)))
    rows = n_pad // LANES

    # Batch-to-lanes: (n_pad, 14) -> (n_pad/128, 1792); contiguous, metadata-only.
    x_rs = x.reshape(rows, GROUP_K).astype(jnp.float32)

    # Block-diagonal weight (1792, 128): w_bd[14*i + c, j] = w[c] if i == j else 0,
    # so (x_rs @ w_bd)[r, j] == dot(x[128*r + j, :], w).
    w_flat = weight.reshape((IN_FEATURES,)).astype(jnp.float32)
    eye = jnp.eye(LANES, dtype=jnp.float32)
    w_bd = (eye[:, None, :] * w_flat[None, :, None]).reshape(GROUP_K, LANES)

    b_scalar = bias.reshape((OUT_FEATURES,)).astype(jnp.float32)

    # Tile over the (reshaped) batch; ragged last block is masked by Pallas, so
    # no padding up to the tile size is ever needed.
    tile_rows = min(DEFAULT_TILE_ROWS, rows)
    grid = (pl.cdiv(rows, tile_rows),)

    out_rs = pl.pallas_call(
        _linreg_kernel,
        out_shape=jax.ShapeDtypeStruct((rows, LANES), jnp.float32),
        grid=grid,
        in_specs=[
            pl.BlockSpec((tile_rows, GROUP_K), lambda i: (i, 0)),   # x: tiled over batch
            pl.BlockSpec((GROUP_K, LANES), lambda i: (0, 0)),       # weight: resident
            pl.BlockSpec(memory_space=pltpu.MemorySpace.SMEM),      # bias: SMEM scalar
        ],
        out_specs=pl.BlockSpec((tile_rows, LANES), lambda i: (i, 0)),
        compiler_params=pltpu.CompilerParams(
            dimension_semantics=("parallel",),  # megacore split on v7x for >=2 steps
        ),
        cost_estimate=pl.CostEstimate(
            flops=2 * rows * GROUP_K * LANES,
            transcendentals=0,
            bytes_accessed=4 * (rows * GROUP_K + GROUP_K * LANES + rows * LANES + 1),
        ),
    )(x_rs, w_bd, b_scalar)

    # (rows, 128) -> (n_pad, 1) is a free contiguous reshape; drop the pad tail.
    return out_rs.reshape(n_pad, OUT_FEATURES)[:n, :]


if __name__ == "__main__":
    key = jax.random.PRNGKey(0)
    kx, kw, kb, kx2, kx3 = jax.random.split(key, 5)

    # Deterministic init mirroring nn.Linear's U(-1/sqrt(fan_in), 1/sqrt(fan_in)).
    bound = 1.0 / jnp.sqrt(jnp.float32(IN_FEATURES))
    weight = jax.random.uniform(
        kw, (OUT_FEATURES, IN_FEATURES), jnp.float32, -bound, bound
    )
    bias = jax.random.uniform(kb, (OUT_FEATURES,), jnp.float32, -bound, bound)

    # Small batch consistent with the module: batch=8, features=14.
    x = jax.random.normal(kx, (8, IN_FEATURES), dtype=jnp.float32)
    out = jax.block_until_ready(linear_regression_forward(x, weight, bias))
    ref = x @ weight.T + bias
    assert out.shape == (8, OUT_FEATURES), out.shape
    assert jnp.allclose(out, ref, atol=1e-5, rtol=1e-5)

    # Ragged batch (not a multiple of 128) exercises the tail-pad + slice path.
    x2 = jax.random.normal(kx2, (37, IN_FEATURES), dtype=jnp.float32)
    out2 = jax.block_until_ready(linear_regression_forward(x2, weight, bias))
    ref2 = x2 @ weight.T + bias
    assert out2.shape == (37, OUT_FEATURES), out2.shape
    assert jnp.allclose(out2, ref2, atol=1e-5, rtol=1e-5)

    # Multiple-of-128 batch exercises the zero-copy (no-pad) lane-dense path.
    x3 = jax.random.normal(kx3, (384, IN_FEATURES), dtype=jnp.float32)
    out3 = jax.block_until_ready(linear_regression_forward(x3, weight, bias))
    ref3 = x3 @ weight.T + bias
    assert out3.shape == (384, OUT_FEATURES), out3.shape
    assert jnp.allclose(out3, ref3, atol=1e-5, rtol=1e-5)

    print("KERNEL_OK")
</pallas_src>

<mosaic_0001>
module attributes {stable_mosaic.version = 11 : i64} {
  func.func @_linreg_kernel(%arg0: i32, %arg1: memref<1x1792xf32, #tpu.memory_space<vmem>>, %arg2: memref<1792x128xf32, #tpu.memory_space<vmem>>, %arg3: memref<1xf32, #tpu.memory_space<smem>>, %arg4: memref<1x128xf32, #tpu.memory_space<vmem>>) attributes {dimension_semantics = [#tpu.dimension_semantics<parallel>], iteration_bounds = array<i64: 1>, scalar_prefetch = 0 : i64, scratch_operands = 0 : i64, tpu.core_type = #tpu.core_type<tc>, window_params = [{transform_indices = @transform_0, window_bounds = array<i64: 1, 1792>}, {pipeline_mode = #tpu.pipeline_mode<synchronous>, transform_indices = @transform_1, window_bounds = array<i64: 1792, 128>}, {transform_indices = @transform_2, window_bounds = array<i64: 1>}, {transform_indices = @transform_3, window_bounds = array<i64: 1, 128>}]} {
    %c0 = arith.constant 0 : index
    %c0_0 = arith.constant 0 : index
    %0 = vector.load %arg1[%c0, %c0_0] : memref<1x1792xf32, #tpu.memory_space<vmem>>, vector<1x1792xf32>
    %c0_1 = arith.constant 0 : index
    %c0_2 = arith.constant 0 : index
    %1 = vector.load %arg2[%c0_1, %c0_2] : memref<1792x128xf32, #tpu.memory_space<vmem>>, vector<1792x128xf32>
    %cst = arith.constant dense<0.000000e+00> : vector<1x128xf32>
    %2 = tpu.matmul %0, %1, %cst {dimension_numbers = #tpu.dot_dimension_numbers<[1], [0], [0], [1], [0, 0, 1, 1], [], []>} : vector<1x1792xf32>, vector<1792x128xf32>, vector<1x128xf32> -> vector<1x128xf32>
    %c0_3 = arith.constant 0 : index
    %3 = memref.load %arg3[%c0_3] : memref<1xf32, #tpu.memory_space<smem>>
    %4 = vector.broadcast %3 : f32 to vector<1x128xf32>
    %5 = arith.addf %2, %4 : vector<1x128xf32>
    %c0_4 = arith.constant 0 : index
    %c0_5 = arith.constant 0 : index
    %6 = vector.load %arg4[%c0_4, %c0_5] : memref<1x128xf32, #tpu.memory_space<vmem>>, vector<1x128xf32>
    tpu.vector_store %arg4[%c0_4, %c0_5], %5 {strides = array<i32>} : memref<1x128xf32, #tpu.memory_space<vmem>>, vector<1x128xf32>,
    return
  }
  func.func @transform_0(%arg0: i32) -> (i32, i32) {
    %c0_i32 = arith.constant 0 : i32
    %c0_i32_0 = arith.constant 0 : i32
    return %arg0, %c0_i32 : i32, i32
  }
  func.func @transform_1(%arg0: i32) -> (i32, i32) {
    %c0_i32 = arith.constant 0 : i32
    %c0_i32_0 = arith.constant 0 : i32
    %c0_i32_1 = arith.constant 0 : i32
    return %c0_i32, %c0_i32_0 : i32, i32
  }
  func.func @transform_2(%arg0: i32) -> i32 {
    %c0_i32 = arith.constant 0 : i32
    %c0_i32_0 = arith.constant 0 : i32
    return %c0_i32 : i32
  }
  func.func @transform_3(%arg0: i32) -> (i32, i32) {
    %c0_i32 = arith.constant 0 : i32
    %c0_i32_0 = arith.constant 0 : i32
    return %arg0, %c0_i32 : i32, i32
  }
}

</mosaic_0001>

<llo_original>
// kernel: linear_regression_forward.1
$region0: #{linear_regression_forward.1}
  #allocation0 [shape = 'u32[]', space=smem, size = 0x4, offset = 0x4, fixed_abs, tag = 'smem constant byte address 0x4 - core index']
  #allocation1 [shape = 'u32[72,128]{1,0:T(1,128)}', space=vmem, size = 0x9000, scoped, tag = 'internal scratch']
  #allocation2 [shape = 'f32[1]{0:T(128)S(6)}', space=smem, size = 0x200, scoped, tag = 'scoped memory for linear_regression_forward.1']
  %s0 = inlined_call_operand.vmem [shape: f32[1,1792], index: 0, kind: input, shape index: {}]
  %s1 = inlined_call_operand.vmem [shape: f32[1792,128], index: 1, kind: input, shape index: {}]
  %s2 = inlined_call_operand.<no memory space> [shape: f32[1], index: 2, kind: input, shape index: {}]
  %s3 = inlined_call_operand.vmem [shape: f32[1,128], index: 3, kind: output, shape index: {}]
  %s4 = sld [smem:[#allocation0]]
  $region22: #{linear_regression_forward.1} parent=0
    _
  %s6 = ssub.s32 1, %s4
  %s7 = scalar_select 0, %s6, %s4
  %8 = sst [smem:[#allocation2]] %s2
  // Predicated region
  $region2: #{linear_regression_forward.1} parent=0 // pred_check
    _
  $region3: #{linear_regression_forward.1} parent=0 // pred_check_branch
    %10 = sbr.rel (0) target = $region5
  $region4: #{linear_regression_forward.1} parent=0 // pred_region
    _
  $region5: #{linear_regression_forward.1} parent=0 // pred_fallthru
    _
  // Predicated region
  $region6: #{linear_regression_forward.1} parent=0 // pred_check
    _
  $region7: #{linear_regression_forward.1} parent=0 // pred_check_branch
    %12 = sbr.rel (0) target = $region9
  $region8: #{linear_regression_forward.1} parent=0 // pred_region
    _
  $region9: #{linear_regression_forward.1} parent=0 // pred_fallthru
    _
  // Predicated region
  $region10: #{linear_regression_forward.1} parent=0 // pred_check
    _
  $region11: #{linear_regression_forward.1} parent=0 // pred_check_branch
    %14 = sbr.rel (0) target = $region13
  $region12: #{linear_regression_forward.1} parent=0 // pred_region
    _
  $region13: #{linear_regression_forward.1} parent=0 // pred_fallthru
    _
  %v15 = vld [vmem:[%s0] sm:$0xff]
  %v16 = vld [vmem:[%s0 + $0x8] sm:$0x3f]
  %v17 = vld [vmem:[%s1] sm:$0xff]
  %v18 = vld [vmem:[%s1 + $0x8] sm:$0xff]
  %v19 = vld [vmem:[%s1 + $0x10] sm:$0xff]
  %v20 = vld [vmem:[%s1 + $0x18] sm:$0xff]
  %v21 = vld [vmem:[%s1 + $0x20] sm:$0xff]
  %v22 = vld [vmem:[%s1 + $0x28] sm:$0xff]
  %v23 = vld [vmem:[%s1 + $0x30] sm:$0xff]
  %v24 = vld [vmem:[%s1 + $0x38] sm:$0xff]
  %v25 = vld [vmem:[%s1 + $0x40] sm:$0xff]
  %v26 = vld [vmem:[%s1 + $0x48] sm:$0xff]
  %v27 = vld [vmem:[%s1 + $0x50] sm:$0xff]
  %v28 = vld [vmem:[%s1 + $0x58] sm:$0xff]
  %v29 = vld [vmem:[%s1 + $0x60] sm:$0xff]
  %v30 = vld [vmem:[%s1 + $0x68] sm:$0xff]
  %v31 = vld [vmem:[%s1 + $0x70] sm:$0xff]
  %v32 = vld [vmem:[%s1 + $0x78] sm:$0xff]
  %v33 = vld [vmem:[%s1 + $0x80] sm:$0xff]
  %v34 = vld [vmem:[%s1 + $0x88] sm:$0xff]
  %v35 = vld [vmem:[%s1 + $0x90] sm:$0xff]
  %v36 = vld [vmem:[%s1 + $0x98] sm:$0xff]
  %v37 = vld [vmem:[%s1 + $0xa0] sm:$0xff]
  %v38 = vld [vmem:[%s1 + $0xa8] sm:$0xff]
  %v39 = vld [vmem:[%s1 + $0xb0] sm:$0xff]
  %v40 = vld [vmem:[%s1 + $0xb8] sm:$0xff]
  %v41 = vld [vmem:[%s1 + $0xc0] sm:$0xff]
  %v42 = vld [vmem:[%s1 + $0xc8] sm:$0xff]
  %v43 = vld [vmem:[%s1 + $0xd0] sm:$0xff]
  %v44 = vld [vmem:[%s1 + $0xd8] sm:$0xff]
  %v45 = vld [vmem:[%s1 + $0xe0] sm:$0xff]
  %v46 = vld [vmem:[%s1 + $0xe8] sm:$0xff]
  %v47 = vld [vmem:[%s1 + $0xf0] sm:$0xff]
  %v48 = vld [vmem:[%s1 + $0xf8] sm:$0xff]
  %v49 = vld [vmem:[%s1 + $0x100] sm:$0xff]
  %v50 = vld [vmem:[%s1 + $0x108] sm:$0xff]
  %v51 = vld [vmem:[%s1 + $0x110] sm:$0xff]
  %v52 = vld [vmem:[%s1 + $0x118] sm:$0xff]
  %v53 = vld [vmem:[%s1 + $0x120] sm:$0xff]
  %v54 = vld [vmem:[%s1 + $0x128] sm:$0xff]
  %v55 = vld [vmem:[%s1 + $0x130] sm:$0xff]
  %v56 = vld [vmem:[%s1 + $0x138] sm:$0xff]
  %v57 = vld [vmem:[%s1 + $0x140] sm:$0xff]
  %v58 = vld [vmem:[%s1 + $0x148] sm:$0xff]
  %v59 = vld [vmem:[%s1 + $0x150] sm:$0xff]
  %v60 = vld [vmem:[%s1 + $0x158] sm:$0xff]
  %v61 = vld [vmem:[%s1 + $0x160] sm:$0xff]
  %v62 = vld [vmem:[%s1 + $0x168] sm:$0xff]
  %v63 = vld [vmem:[%s1 + $0x170] sm:$0xff]
  %v64 = vld [vmem:[%s1 + $0x178] sm:$0xff]
  %v65 = vld [vmem:[%s1 + $0x180] sm:$0xff]
  %v66 = vld [vmem:[%s1 + $0x188] sm:$0xff]
  %v67 = vld [vmem:[%s1 + $0x190] sm:$0xff]
  %v68 = vld [vmem:[%s1 + $0x198] sm:$0xff]
  %v69 = vld [vmem:[%s1 + $0x1a0] sm:$0xff]
  %v70 = vld [vmem:[%s1 + $0x1a8] sm:$0xff]
  %v71 = vld [vmem:[%s1 + $0x1b0] sm:$0xff]
  %v72 = vld [vmem:[%s1 + $0x1b8] sm:$0xff]
  %v73 = vld [vmem:[%s1 + $0x1c0] sm:$0xff]
  %v74 = vld [vmem:[%s1 + $0x1c8] sm:$0xff]
  %v75 = vld [vmem:[%s1 + $0x1d0] sm:$0xff]
  %v76 = vld [vmem:[%s1 + $0x1d8] sm:$0xff]
  %v77 = vld [vmem:[%s1 + $0x1e0] sm:$0xff]
  %v78 = vld [vmem:[%s1 + $0x1e8] sm:$0xff]
  %v79 = vld [vmem:[%s1 + $0x1f0] sm:$0xff]
  %v80 = vld [vmem:[%s1 + $0x1f8] sm:$0xff]
  %v81 = vld [vmem:[%s1 + $0x200] sm:$0xff]
  %v82 = vld [vmem:[%s1 + $0x208] sm:$0xff]
  %v83 = vld [vmem:[%s1 + $0x210] sm:$0xff]
  %v84 = vld [vmem:[%s1 + $0x218] sm:$0xff]
  %v85 = vld [vmem:[%s1 + $0x220] sm:$0xff]
  %v86 = vld [vmem:[%s1 + $0x228] sm:$0xff]
  %v87 = vld [vmem:[%s1 + $0x230] sm:$0xff]
  %v88 = vld [vmem:[%s1 + $0x238] sm:$0xff]
  %v89 = vld [vmem:[%s1 + $0x240] sm:$0xff]
  %v90 = vld [vmem:[%s1 + $0x248] sm:$0xff]
  %v91 = vld [vmem:[%s1 + $0x250] sm:$0xff]
  %v92 = vld [vmem:[%s1 + $0x258] sm:$0xff]
  %v93 = vld [vmem:[%s1 + $0x260] sm:$0xff]
  %v94 = vld [vmem:[%s1 + $0x268] sm:$0xff]
  %v95 = vld [vmem:[%s1 + $0x270] sm:$0xff]
  %v96 = vld [vmem:[%s1 + $0x278] sm:$0xff]
  %v97 = vld [vmem:[%s1 + $0x280] sm:$0xff]
  %v98 = vld [vmem:[%s1 + $0x288] sm:$0xff]
  %v99 = vld [vmem:[%s1 + $0x290] sm:$0xff]
  %v100 = vld [vmem:[%s1 + $0x298] sm:$0xff]
  %v101 = vld [vmem:[%s1 + $0x2a0] sm:$0xff]
  %v102 = vld [vmem:[%s1 + $0x2a8] sm:$0xff]
  %v103 = vld [vmem:[%s1 + $0x2b0] sm:$0xff]
  %v104 = vld [vmem:[%s1 + $0x2b8] sm:$0xff]
  %v105 = vld [vmem:[%s1 + $0x2c0] sm:$0xff]
  %v106 = vld [vmem:[%s1 + $0x2c8] sm:$0xff]
  %v107 = vld [vmem:[%s1 + $0x2d0] sm:$0xff]
  %v108 = vld [vmem:[%s1 + $0x2d8] sm:$0xff]
  %v109 = vld [vmem:[%s1 + $0x2e0] sm:$0xff]
  %v110 = vld [vmem:[%s1 + $0x2e8] sm:$0xff]
  %v111 = vld [vmem:[%s1 + $0x2f0] sm:$0xff]
  %v112 = vld [vmem:[%s1 + $0x2f8] sm:$0xff]
  %v113 = vld [vmem:[%s1 + $0x300] sm:$0xff]
  %v114 = vld [vmem:[%s1 + $0x308] sm:$0xff]
  %v115 = vld [vmem:[%s1 + $0x310] sm:$0xff]
  %v116 = vld [vmem:[%s1 + $0x318] sm:$0xff]
  %v117 = vld [vmem:[%s1 + $0x320] sm:$0xff]
  %v118 = vld [vmem:[%s1 + $0x328] sm:$0xff]
  %v119 = vld [vmem:[%s1 + $0x330] sm:$0xff]
  %v120 = vld [vmem:[%s1 + $0x338] sm:$0xff]
  %v121 = vld [vmem:[%s1 + $0x340] sm:$0xff]
  %v122 = vld [vmem:[%s1 + $0x348] sm:$0xff]
  %v123 = vld [vmem:[%s1 + $0x350] sm:$0xff]
  %v124 = vld [vmem:[%s1 + $0x358] sm:$0xff]
  %v125 = vld [vmem:[%s1 + $0x360] sm:$0xff]
  %v126 = vld [vmem:[%s1 + $0x368] sm:$0xff]
  %v127 = vld [vmem:[%s1 + $0x370] sm:$0xff]
  %v128 = vld [vmem:[%s1 + $0x378] sm:$0xff]
  %v129 = vld [vmem:[%s1 + $0x380] sm:$0xff]
  %v130 = vld [vmem:[%s1 + $0x388] sm:$0xff]
  %v131 = vld [vmem:[%s1 + $0x390] sm:$0xff]
  %v132 = vld [vmem:[%s1 + $0x398] sm:$0xff]
  %v133 = vld [vmem:[%s1 + $0x3a0] sm:$0xff]
  %v134 = vld [vmem:[%s1 + $0x3a8] sm:$0xff]
  %v135 = vld [vmem:[%s1 + $0x3b0] sm:$0xff]
  %v136 = vld [vmem:[%s1 + $0x3b8] sm:$0xff]
  %v137 = vld [vmem:[%s1 + $0x3c0] sm:$0xff]
  %v138 = vld [vmem:[%s1 + $0x3c8] sm:$0xff]
  %v139 = vld [vmem:[%s1 + $0x3d0] sm:$0xff]
  %v140 = vld [vmem:[%s1 + $0x3d8] sm:$0xff]
  %v141 = vld [vmem:[%s1 + $0x3e0] sm:$0xff]
  %v142 = vld [vmem:[%s1 + $0x3e8] sm:$0xff]
  %v143 = vld [vmem:[%s1 + $0x3f0] sm:$0xff]
  %v144 = vld [vmem:[%s1 + $0x3f8] sm:$0xff]
  %v145 = vld [vmem:[%s1 + $0x400] sm:$0xff]
  %v146 = vld [vmem:[%s1 + $0x408] sm:$0xff]
  %v147 = vld [vmem:[%s1 + $0x410] sm:$0xff]
  %v148 = vld [vmem:[%s1 + $0x418] sm:$0xff]
  %v149 = vld [vmem:[%s1 + $0x420] sm:$0xff]
  %v150 = vld [vmem:[%s1 + $0x428] sm:$0xff]
  %v151 = vld [vmem:[%s1 + $0x430] sm:$0xff]
  %v152 = vld [vmem:[%s1 + $0x438] sm:$0xff]
  %v153 = vld [vmem:[%s1 + $0x440] sm:$0xff]
  %v154 = vld [vmem:[%s1 + $0x448] sm:$0xff]
  %v155 = vld [vmem:[%s1 + $0x450] sm:$0xff]
  %v156 = vld [vmem:[%s1 + $0x458] sm:$0xff]
  %v157 = vld [vmem:[%s1 + $0x460] sm:$0xff]
  %v158 = vld [vmem:[%s1 + $0x468] sm:$0xff]
  %v159 = vld [vmem:[%s1 + $0x470] sm:$0xff]
  %v160 = vld [vmem:[%s1 + $0x478] sm:$0xff]
  %v161 = vld [vmem:[%s1 + $0x480] sm:$0xff]
  %v162 = vld [vmem:[%s1 + $0x488] sm:$0xff]
  %v163 = vld [vmem:[%s1 + $0x490] sm:$0xff]
  %v164 = vld [vmem:[%s1 + $0x498] sm:$0xff]
  %v165 = vld [vmem:[%s1 + $0x4a0] sm:$0xff]
  %v166 = vld [vmem:[%s1 + $0x4a8] sm:$0xff]
  %v167 = vld [vmem:[%s1 + $0x4b0] sm:$0xff]
  %v168 = vld [vmem:[%s1 + $0x4b8] sm:$0xff]
  %v169 = vld [vmem:[%s1 + $0x4c0] sm:$0xff]
  %v170 = vld [vmem:[%s1 + $0x4c8] sm:$0xff]
  %v171 = vld [vmem:[%s1 + $0x4d0] sm:$0xff]
  %v172 = vld [vmem:[%s1 + $0x4d8] sm:$0xff]
  %v173 = vld [vmem:[%s1 + $0x4e0] sm:$0xff]
  %v174 = vld [vmem:[%s1 + $0x4e8] sm:$0xff]
  %v175 = vld [vmem:[%s1 + $0x4f0] sm:$0xff]
  %v176 = vld [vmem:[%s1 + $0x4f8] sm:$0xff]
  %v177 = vld [vmem:[%s1 + $0x500] sm:$0xff]
  %v178 = vld [vmem:[%s1 + $0x508] sm:$0xff]
  %v179 = vld [vmem:[%s1 + $0x510] sm:$0xff]
  %v180 = vld [vmem:[%s1 + $0x518] sm:$0xff]
  %v181 = vld [vmem:[%s1 + $0x520] sm:$0xff]
  %v182 = vld [vmem:[%s1 + $0x528] sm:$0xff]
  %v183 = vld [vmem:[%s1 + $0x530] sm:$0xff]
  %v184 = vld [vmem:[%s1 + $0x538] sm:$0xff]
  %v185 = vld [vmem:[%s1 + $0x540] sm:$0xff]
  %v186 = vld [vmem:[%s1 + $0x548] sm:$0xff]
  %v187 = vld [vmem:[%s1 + $0x550] sm:$0xff]
  %v188 = vld [vmem:[%s1 + $0x558] sm:$0xff]
  %v189 = vld [vmem:[%s1 + $0x560] sm:$0xff]
  %v190 = vld [vmem:[%s1 + $0x568] sm:$0xff]
  %v191 = vld [vmem:[%s1 + $0x570] sm:$0xff]
  %v192 = vld [vmem:[%s1 + $0x578] sm:$0xff]
  %v193 = vld [vmem:[%s1 + $0x580] sm:$0xff]
  %v194 = vld [vmem:[%s1 + $0x588] sm:$0xff]
  %v195 = vld [vmem:[%s1 + $0x590] sm:$0xff]
  %v196 = vld [vmem:[%s1 + $0x598] sm:$0xff]
  %v197 = vld [vmem:[%s1 + $0x5a0] sm:$0xff]
  %v198 = vld [vmem:[%s1 + $0x5a8] sm:$0xff]
  %v199 = vld [vmem:[%s1 + $0x5b0] sm:$0xff]
  %v200 = vld [vmem:[%s1 + $0x5b8] sm:$0xff]
  %v201 = vld [vmem:[%s1 + $0x5c0] sm:$0xff]
  %v202 = vld [vmem:[%s1 + $0x5c8] sm:$0xff]
  %v203 = vld [vmem:[%s1 + $0x5d0] sm:$0xff]
  %v204 = vld [vmem:[%s1 + $0x5d8] sm:$0xff]
  %v205 = vld [vmem:[%s1 + $0x5e0] sm:$0xff]
  %v206 = vld [vmem:[%s1 + $0x5e8] sm:$0xff]
  %v207 = vld [vmem:[%s1 + $0x5f0] sm:$0xff]
  %v208 = vld [vmem:[%s1 + $0x5f8] sm:$0xff]
  %v209 = vld [vmem:[%s1 + $0x600] sm:$0xff]
  %v210 = vld [vmem:[%s1 + $0x608] sm:$0xff]
  %v211 = vld [vmem:[%s1 + $0x610] sm:$0xff]
  %v212 = vld [vmem:[%s1 + $0x618] sm:$0xff]
  %v213 = vld [vmem:[%s1 + $0x620] sm:$0xff]
  %v214 = vld [vmem:[%s1 + $0x628] sm:$0xff]
  %v215 = vld [vmem:[%s1 + $0x630] sm:$0xff]
  %v216 = vld [vmem:[%s1 + $0x638] sm:$0xff]
  %v217 = vld [vmem:[%s1 + $0x640] sm:$0xff]
  %v218 = vld [vmem:[%s1 + $0x648] sm:$0xff]
  %v219 = vld [vmem:[%s1 + $0x650] sm:$0xff]
  %v220 = vld [vmem:[%s1 + $0x658] sm:$0xff]
  %v221 = vld [vmem:[%s1 + $0x660] sm:$0xff]
  %v222 = vld [vmem:[%s1 + $0x668] sm:$0xff]
  %v223 = vld [vmem:[%s1 + $0x670] sm:$0xff]
  %v224 = vld [vmem:[%s1 + $0x678] sm:$0xff]
  %v225 = vld [vmem:[%s1 + $0x680] sm:$0xff]
  %v226 = vld [vmem:[%s1 + $0x688] sm:$0xff]
  %v227 = vld [vmem:[%s1 + $0x690] sm:$0xff]
  %v228 = vld [vmem:[%s1 + $0x698] sm:$0xff]
  %v229 = vld [vmem:[%s1 + $0x6a0] sm:$0xff]
  %v230 = vld [vmem:[%s1 + $0x6a8] sm:$0xff]
  %v231 = vld [vmem:[%s1 + $0x6b0] sm:$0xff]
  %v232 = vld [vmem:[%s1 + $0x6b8] sm:$0xff]
  %v233 = vld [vmem:[%s1 + $0x6c0] sm:$0xff]
  %v234 = vld [vmem:[%s1 + $0x6c8] sm:$0xff]
  %v235 = vld [vmem:[%s1 + $0x6d0] sm:$0xff]
  %v236 = vld [vmem:[%s1 + $0x6d8] sm:$0xff]
  %v237 = vld [vmem:[%s1 + $0x6e0] sm:$0xff]
  %v238 = vld [vmem:[%s1 + $0x6e8] sm:$0xff]
  %v239 = vld [vmem:[%s1 + $0x6f0] sm:$0xff]
  %v240 = vld [vmem:[%s1 + $0x6f8] sm:$0xff]
  %s241 = sld [smem:[#allocation2]]
  %v242 = vstv %s241
  %v245 = vperm.slane %v15, 0
  %v246 = vperm.slane %v15, 1
  %v247 = vperm.slane %v15, 2
  %v248 = vperm.slane %v15, 3
  %v249 = vperm.slane %v15, 4
  %v250 = vperm.slane %v15, 5
  %v251 = vperm.slane %v15, 6
  %v252 = vperm.slane %v15, 7
  %v253 = vperm.slane %v16, 0
  %v254 = vperm.slane %v16, 1
  %v255 = vperm.slane %v16, 2
  %v256 = vperm.slane %v16, 3
  %v257 = vperm.slane %v16, 4
  %v258 = vperm.slane %v16, 5
  %273 = vmatpush.msra.mxu0 %v32
  %274 = vmatpush.msra.mxu0 %v31
  %275 = vmatpush.msra.mxu0 %v30
  %276 = vmatpush.msra.mxu0 %v29
  %277 = vmatpush.msra.mxu0 %v28
  %278 = vmatpush.msra.mxu0 %v27
  %279 = vmatpush.msra.mxu0 %v26
  %280 = vmatpush.msra.mxu0 %v25
  %281 = vmatpush.msra.mxu0 %v24
  %282 = vmatpush.msra.mxu0 %v23
  %283 = vmatpush.msra.mxu0 %v22
  %284 = vmatpush.msra.mxu0 %v21
  %285 = vmatpush.msra.mxu0 %v20
  %286 = vmatpush.msra.mxu0 %v19
  %287 = vmatpush.msra.mxu0 %v18
  %288 = vmatpush.msra.mxu0 %v17
  %289 = vmatmul.f32.gmra.mxu0 %v245
  %v290 = vpop.f32.mrf.mxu0
  %v291 = vadd.f32 %v242, %v290
  %292 = vdwg.mxu0
  %293 = vmatpush.msra.mxu0 %v48
  %294 = vmatpush.msra.mxu0 %v47
  %295 = vmatpush.msra.mxu0 %v46
  %296 = vmatpush.msra.mxu0 %v45
  %297 = vmatpush.msra.mxu0 %v44
  %298 = vmatpush.msra.mxu0 %v43
  %299 = vmatpush.msra.mxu0 %v42
  %300 = vmatpush.msra.mxu0 %v41
  %301 = vmatpush.msra.mxu0 %v40
  %302 = vmatpush.msra.mxu0 %v39
  %303 = vmatpush.msra.mxu0 %v38
  %304 = vmatpush.msra.mxu0 %v37
  %305 = vmatpush.msra.mxu0 %v36
  %306 = vmatpush.msra.mxu0 %v35
  %307 = vmatpush.msra.mxu0 %v34
  %308 = vmatpush.msra.mxu0 %v33
  %309 = vmatmul.f32.gmra.mxu0 %v246
  %v310 = vpop.f32.mrf.mxu0
  %v311 = vadd.f32 %v291, %v310
  %312 = vdwg.mxu0
  %313 = vmatpush.msra.mxu0 %v64
  %314 = vmatpush.msra.mxu0 %v63
  %315 = vmatpush.msra.mxu0 %v62
  %316 = vmatpush.msra.mxu0 %v61
  %317 = vmatpush.msra.mxu0 %v60
  %318 = vmatpush.msra.mxu0 %v59
  %319 = vmatpush.msra.mxu0 %v58
  %320 = vmatpush.msra.mxu0 %v57
  %321 = vmatpush.msra.mxu0 %v56
  %322 = vmatpush.msra.mxu0 %v55
  %323 = vmatpush.msra.mxu0 %v54
  %324 = vmatpush.msra.mxu0 %v53
  %325 = vmatpush.msra.mxu0 %v52
  %326 = vmatpush.msra.mxu0 %v51
  %327 = vmatpush.msra.mxu0 %v50
  %328 = vmatpush.msra.mxu0 %v49
  %329 = vmatmul.f32.gmra.mxu0 %v247
  %v330 = vpop.f32.mrf.mxu0
  %v331 = vadd.f32 %v311, %v330
  %332 = vdwg.mxu0
  %333 = vmatpush.msra.mxu0 %v80
  %334 = vmatpush.msra.mxu0 %v79
  %335 = vmatpush.msra.mxu0 %v78
  %336 = vmatpush.msra.mxu0 %v77
  %337 = vmatpush.msra.mxu0 %v76
  %338 = vmatpush.msra.mxu0 %v75
  %339 = vmatpush.msra.mxu0 %v74
  %340 = vmatpush.msra.mxu0 %v73
  %341 = vmatpush.msra.mxu0 %v72
  %342 = vmatpush.msra.mxu0 %v71
  %343 = vmatpush.msra.mxu0 %v70
  %344 = vmatpush.msra.mxu0 %v69
  %345 = vmatpush.msra.mxu0 %v68
  %346 = vmatpush.msra.mxu0 %v67
  %347 = vmatpush.msra.mxu0 %v66
  %348 = vmatpush.msra.mxu0 %v65
  %349 = vmatmul.f32.gmra.mxu0 %v248
  %v350 = vpop.f32.mrf.mxu0
  %v351 = vadd.f32 %v331, %v350
  %352 = vdwg.mxu0
  %353 = vmatpush.msra.mxu0 %v96
  %354 = vmatpush.msra.mxu0 %v95
  %355 = vmatpush.msra.mxu0 %v94
  %356 = vmatpush.msra.mxu0 %v93
  %357 = vmatpush.msra.mxu0 %v92
  %358 = vmatpush.msra.mxu0 %v91
  %359 = vmatpush.msra.mxu0 %v90
  %360 = vmatpush.msra.mxu0 %v89
  %361 = vmatpush.msra.mxu0 %v88
  %362 = vmatpush.msra.mxu0 %v87
  %363 = vmatpush.msra.mxu0 %v86
  %364 = vmatpush.msra.mxu0 %v85
  %365 = vmatpush.msra.mxu0 %v84
  %366 = vmatpush.msra.mxu0 %v83
  %367 = vmatpush.msra.mxu0 %v82
  %368 = vmatpush.msra.mxu0 %v81
  %369 = vmatmul.f32.gmra.mxu0 %v249
  %v370 = vpop.f32.mrf.mxu0
  %v371 = vadd.f32 %v351, %v370
  %372 = vdwg.mxu0
  %373 = vmatpush.msra.mxu0 %v112
  %374 = vmatpush.msra.mxu0 %v111
  %375 = vmatpush.msra.mxu0 %v110
  %376 = vmatpush.msra.mxu0 %v109
  %377 = vmatpush.msra.mxu0 %v108
  %378 = vmatpush.msra.mxu0 %v107
  %379 = vmatpush.msra.mxu0 %v106
  %380 = vmatpush.msra.mxu0 %v105
  %381 = vmatpush.msra.mxu0 %v104
  %382 = vmatpush.msra.mxu0 %v103
  %383 = vmatpush.msra.mxu0 %v102
  %384 = vmatpush.msra.mxu0 %v101
  %385 = vmatpush.msra.mxu0 %v100
  %386 = vmatpush.msra.mxu0 %v99
  %387 = vmatpush.msra.mxu0 %v98
  %388 = vmatpush.msra.mxu0 %v97
  %389 = vmatmul.f32.gmra.mxu0 %v250
  %v390 = vpop.f32.mrf.mxu0
  %v391 = vadd.f32 %v371, %v390
  %392 = vdwg.mxu0
  %393 = vmatpush.msra.mxu0 %v128
  %394 = vmatpush.msra.mxu0 %v127
  %395 = vmatpush.msra.mxu0 %v126
  %396 = vmatpush.msra.mxu0 %v125
  %397 = vmatpush.msra.mxu0 %v124
  %398 = vmatpush.msra.mxu0 %v123
  %399 = vmatpush.msra.mxu0 %v122
  %400 = vmatpush.msra.mxu0 %v121
  %401 = vmatpush.msra.mxu0 %v120
  %402 = vmatpush.msra.mxu0 %v119
  %403 = vmatpush.msra.mxu0 %v118
  %404 = vmatpush.msra.mxu0 %v117
  %405 = vmatpush.msra.mxu0 %v116
  %406 = vmatpush.msra.mxu0 %v115
  %407 = vmatpush.msra.mxu0 %v114
  %408 = vmatpush.msra.mxu0 %v113
  %409 = vmatmul.f32.gmra.mxu0 %v251
  %v410 = vpop.f32.mrf.mxu0
  %v411 = vadd.f32 %v391, %v410
  %412 = vdwg.mxu0
  %413 = vmatpush.msra.mxu0 %v144
  %414 = vmatpush.msra.mxu0 %v143
  %415 = vmatpush.msra.mxu0 %v142
  %416 = vmatpush.msra.mxu0 %v141
  %417 = vmatpush.msra.mxu0 %v140
  %418 = vmatpush.msra.mxu0 %v139
  %419 = vmatpush.msra.mxu0 %v138
  %420 = vmatpush.msra.mxu0 %v137
  %421 = vmatpush.msra.mxu0 %v136
  %422 = vmatpush.msra.mxu0 %v135
  %423 = vmatpush.msra.mxu0 %v134
  %424 = vmatpush.msra.mxu0 %v133
  %425 = vmatpush.msra.mxu0 %v132
  %426 = vmatpush.msra.mxu0 %v131
  %427 = vmatpush.msra.mxu0 %v130
  %428 = vmatpush.msra.mxu0 %v129
  %429 = vmatmul.f32.gmra.mxu0 %v252
  %v430 = vpop.f32.mrf.mxu0
  %v431 = vadd.f32 %v411, %v430
  %432 = vdwg.mxu0
  %433 = vmatpush.msra.mxu0 %v160
  %434 = vmatpush.msra.mxu0 %v159
  %435 = vmatpush.msra.mxu0 %v158
  %436 = vmatpush.msra.mxu0 %v157
  %437 = vmatpush.msra.mxu0 %v156
  %438 = vmatpush.msra.mxu0 %v155
  %439 = vmatpush.msra.mxu0 %v154
  %440 = vmatpush.msra.mxu0 %v153
  %441 = vmatpush.msra.mxu0 %v152
  %442 = vmatpush.msra.mxu0 %v151
  %443 = vmatpush.msra.mxu0 %v150
  %444 = vmatpush.msra.mxu0 %v149
  %445 = vmatpush.msra.mxu0 %v148
  %446 = vmatpush.msra.mxu0 %v147
  %447 = vmatpush.msra.mxu0 %v146
  %448 = vmatpush.msra.mxu0 %v145
  %449 = vmatmul.f32.gmra.mxu0 %v253
  %v450 = vpop.f32.mrf.mxu0
  %v451 = vadd.f32 %v431, %v450
  %452 = vdwg.mxu0
  %453 = vmatpush.msra.mxu0 %v176
  %454 = vmatpush.msra.mxu0 %v175
  %455 = vmatpush.msra.mxu0 %v174
  %456 = vmatpush.msra.mxu0 %v173
  %457 = vmatpush.msra.mxu0 %v172
  %458 = vmatpush.msra.mxu0 %v171
  %459 = vmatpush.msra.mxu0 %v170
  %460 = vmatpush.msra.mxu0 %v169
  %461 = vmatpush.msra.mxu0 %v168
  %462 = vmatpush.msra.mxu0 %v167
  %463 = vmatpush.msra.mxu0 %v166
  %464 = vmatpush.msra.mxu0 %v165
  %465 = vmatpush.msra.mxu0 %v164
  %466 = vmatpush.msra.mxu0 %v163
  %467 = vmatpush.msra.mxu0 %v162
  %468 = vmatpush.msra.mxu0 %v161
  %469 = vmatmul.f32.gmra.mxu0 %v254
  %v470 = vpop.f32.mrf.mxu0
  %v471 = vadd.f32 %v451, %v470
  %472 = vdwg.mxu0
  %473 = vmatpush.msra.mxu0 %v192
  %474 = vmatpush.msra.mxu0 %v191
  %475 = vmatpush.msra.mxu0 %v190
  %476 = vmatpush.msra.mxu0 %v189
  %477 = vmatpush.msra.mxu0 %v188
  %478 = vmatpush.msra.mxu0 %v187
  %479 = vmatpush.msra.mxu0 %v186
  %480 = vmatpush.msra.mxu0 %v185
  %481 = vmatpush.msra.mxu0 %v184
  %482 = vmatpush.msra.mxu0 %v183
  %483 = vmatpush.msra.mxu0 %v182
  %484 = vmatpush.msra.mxu0 %v181
  %485 = vmatpush.msra.mxu0 %v180
  %486 = vmatpush.msra.mxu0 %v179
  %487 = vmatpush.msra.mxu0 %v178
  %488 = vmatpush.msra.mxu0 %v177
  %489 = vmatmul.f32.gmra.mxu0 %v255
  %v490 = vpop.f32.mrf.mxu0
  %v491 = vadd.f32 %v471, %v490
  %492 = vdwg.mxu0
  %493 = vmatpush.msra.mxu0 %v208
  %494 = vmatpush.msra.mxu0 %v207
  %495 = vmatpush.msra.mxu0 %v206
  %496 = vmatpush.msra.mxu0 %v205
  %497 = vmatpush.msra.mxu0 %v204
  %498 = vmatpush.msra.mxu0 %v203
  %499 = vmatpush.msra.mxu0 %v202
  %500 = vmatpush.msra.mxu0 %v201
  %501 = vmatpush.msra.mxu0 %v200
  %502 = vmatpush.msra.mxu0 %v199
  %503 = vmatpush.msra.mxu0 %v198
  %504 = vmatpush.msra.mxu0 %v197
  %505 = vmatpush.msra.mxu0 %v196
  %506 = vmatpush.msra.mxu0 %v195
  %507 = vmatpush.msra.mxu0 %v194
  %508 = vmatpush.msra.mxu0 %v193
  %509 = vmatmul.f32.gmra.mxu0 %v256
  %v510 = vpop.f32.mrf.mxu0
  %v511 = vadd.f32 %v491, %v510
  %512 = vdwg.mxu0
  %513 = vmatpush.msra.mxu0 %v224
  %514 = vmatpush.msra.mxu0 %v223
  %515 = vmatpush.msra.mxu0 %v222
  %516 = vmatpush.msra.mxu0 %v221
  %517 = vmatpush.msra.mxu0 %v220
  %518 = vmatpush.msra.mxu0 %v219
  %519 = vmatpush.msra.mxu0 %v218
  %520 = vmatpush.msra.mxu0 %v217
  %521 = vmatpush.msra.mxu0 %v216
  %522 = vmatpush.msra.mxu0 %v215
  %523 = vmatpush.msra.mxu0 %v214
  %524 = vmatpush.msra.mxu0 %v213
  %525 = vmatpush.msra.mxu0 %v212
  %526 = vmatpush.msra.mxu0 %v211
  %527 = vmatpush.msra.mxu0 %v210
  %528 = vmatpush.msra.mxu0 %v209
  %529 = vmatmul.f32.gmra.mxu0 %v257
  %v530 = vpop.f32.mrf.mxu0
  %v531 = vadd.f32 %v511, %v530
  %532 = vdwg.mxu0
  %533 = vmatpush.msra.mxu0 %v240
  %534 = vmatpush.msra.mxu0 %v239
  %535 = vmatpush.msra.mxu0 %v238
  %536 = vmatpush.msra.mxu0 %v237
  %537 = vmatpush.msra.mxu0 %v236
  %538 = vmatpush.msra.mxu0 %v235
  %539 = vmatpush.msra.mxu0 %v234
  %540 = vmatpush.msra.mxu0 %v233
  %541 = vmatpush.msra.mxu0 %v232
  %542 = vmatpush.msra.mxu0 %v231
  %543 = vmatpush.msra.mxu0 %v230
  %544 = vmatpush.msra.mxu0 %v229
  %545 = vmatpush.msra.mxu0 %v228
  %546 = vmatpush.msra.mxu0 %v227
  %547 = vmatpush.msra.mxu0 %v226
  %548 = vmatpush.msra.mxu0 %v225
  %549 = vmatmul.f32.gmra.mxu0 %v258
  %v550 = vpop.f32.mrf.mxu0
  %v551 = vadd.f32 %v531, %v550
  %552 = vdwg.mxu0
  %553 = vst [vmem:[%s3] sm:$0x1] %v551
  // Predicated region
  $region14: #{linear_regression_forward.1} parent=0 // pred_check
    _
  $region15: #{linear_regression_forward.1} parent=0 // pred_check_branch
    %555 = sbr.rel (0) target = $region17
  $region16: #{linear_regression_forward.1} parent=0 // pred_region
    _
  $region17: #{linear_regression_forward.1} parent=0 // pred_fallthru
    _
  // Predicated region
  $region18: #{linear_regression_forward.1} parent=0 // pred_check
    _
  $region19: #{linear_regression_forward.1} parent=0 // pred_check_branch
    %557 = sbr.rel (0) target = $region21
  $region20: #{linear_regression_forward.1} parent=0 // pred_region
    _
  $region21: #{linear_regression_forward.1} parent=0 // pred_fallthru
    _

</llo_original>
